<compile_context>
chip_gen: v6e
topology: v6e:2x2x1
jax: 0.10.0
libtpu: 0.0.40
codegen_flags: <defaults>
</compile_context>

<pallas_src>
import functools

import jax
import jax.numpy as jnp
import numpy as np
from jax import lax
from jax.experimental import pallas as pl
from jax.experimental.pallas import tpu as pltpu


# ----------------------------------------------------------------------------
# helpers
# ----------------------------------------------------------------------------
_MIB = 1024 * 1024


def _round_up(x, m):
    return (x + m - 1) // m * m


def _apply_act(y, act):
    if act == "relu":
        return jnp.maximum(y, 0.0)
    if act == "leaky_relu":                 # nn.LeakyReLU default slope 0.01
        return jnp.where(y >= 0.0, y, 0.01 * y)
    if act == "tanh":
        return jnp.tanh(y)
    return y


@functools.lru_cache(maxsize=1)
def _tpu_config():
    """(physical VMEM bytes, has >1 TensorCore per chip) — best effort."""
    vmem_cap = 128 * _MIB
    multi_tc = False
    try:
        cap = int(pltpu.get_tpu_info().vmem_capacity_bytes)
        if 32 * _MIB <= cap <= 256 * _MIB:
            vmem_cap = cap
    except Exception:
        pass
    try:
        kind = jax.devices()[0].device_kind.lower()
        multi_tc = any(t in kind for t in ("v4", "v5p", "v7", "7x"))
    except Exception:
        pass
    return vmem_cap, multi_tc


# ----------------------------------------------------------------------------
# Pallas kernels: fused  out = act(X @ W + b (+ residual))
#
# Whole-K variants: 2-D grid (m, n), no accumulator scratch — dot feeds the
# f32 epilogue directly, store bf16. Fallback variants keep a 3-D grid with an
# f32 VMEM accumulator when the whole-K blocks would not fit the VMEM budget.
# ----------------------------------------------------------------------------
def _mm_whole_kernel(x_ref, w_ref, b_ref, o_ref, *, act):
    y = jnp.dot(x_ref[...], w_ref[...], preferred_element_type=jnp.float32)
    y = _apply_act(y + b_ref[...], act)
    o_ref[...] = y.astype(o_ref.dtype)


def _mm_whole_res_kernel(x_ref, w_ref, b_ref, r_ref, o_ref, *, act):
    y = jnp.dot(x_ref[...], w_ref[...], preferred_element_type=jnp.float32)
    y = _apply_act(y + b_ref[...] + r_ref[...].astype(jnp.float32), act)
    o_ref[...] = y.astype(o_ref.dtype)


def _mm_acc_kernel(x_ref, w_ref, b_ref, o_ref, acc_ref, *, act):
    k = pl.program_id(2)

    @pl.when(k == 0)
    def _():
        acc_ref[...] = jnp.zeros_like(acc_ref)

    acc_ref[...] += jnp.dot(x_ref[...], w_ref[...],
                            preferred_element_type=jnp.float32)

    @pl.when(k == pl.num_programs(2) - 1)
    def _():
        o_ref[...] = _apply_act(acc_ref[...] + b_ref[...], act).astype(o_ref.dtype)


def _mm_acc_res_kernel(x_ref, w_ref, b_ref, r_ref, o_ref, acc_ref, *, act):
    k = pl.program_id(2)

    @pl.when(k == 0)
    def _():
        acc_ref[...] = jnp.zeros_like(acc_ref)

    acc_ref[...] += jnp.dot(x_ref[...], w_ref[...],
                            preferred_element_type=jnp.float32)

    @pl.when(k == pl.num_programs(2) - 1)
    def _():
        y = acc_ref[...] + b_ref[...] + r_ref[...].astype(jnp.float32)
        o_ref[...] = _apply_act(y, act).astype(o_ref.dtype)


def matmul_prepped(x, w_pad, b_pad, n_out, act=None, residual=None,
                   out_dtype=jnp.bfloat16):
    """act(x[:, :K] @ w_pad[:K, :n_out] + b (+res)). w_pad bf16 (Kp, Np)."""
    M, K = x.shape
    Kp, Np = w_pad.shape
    assert K <= Kp and n_out <= Np

    # 16-row granularity for bf16 sublane packing.
    Mp0 = _round_up(max(M, 16), 16)
    if Mp0 <= 512:
        tm, Mp = Mp0, Mp0
    else:
        tm, Mp = 256, _round_up(Mp0, 256)

    vmem_cap, multi_tc = _tpu_config()
    # N split only pays off when two TensorCores can each take an N tile.
    tn = 256 if (multi_tc and Np >= 512 and Np % 256 == 0) else Np

    limit_cap = max(min(vmem_cap - 16 * _MIB, 100 * _MIB), 32 * _MIB)
    budget = limit_cap - 8 * _MIB
    out_bytes = jnp.dtype(out_dtype).itemsize
    has_res = residual is not None

    def _need(tk):                      # double-buffered block-buffer bytes
        b = 2 * (tm * tk * 2 + tk * tn * 2 + tn * 4) + 2 * tm * tn * out_bytes
        if has_res:
            b += 2 * tm * tn * 2
        if tk < Kp:
            b += tm * tn * 4            # f32 accumulator scratch
        return b

    tk = 128
    for cand in range(Kp, 0, -128):     # largest divisor of Kp under budget
        if Kp % cand == 0 and _need(cand) <= budget:
            tk = cand
            break
    whole_k = (tk == Kp)
    vmem_limit = int(min(_need(tk) * 1.25 + 8 * _MIB, limit_cap))

    xp = jnp.pad(x.astype(jnp.bfloat16), ((0, Mp - M), (0, Kp - K)))
    args = [xp, w_pad, b_pad]

    if whole_k:
        grid = (Mp // tm, Np // tn)
        in_specs = [
            pl.BlockSpec((tm, Kp), lambda m, n: (m, 0)),   # X (whole K)
            pl.BlockSpec((Kp, tn), lambda m, n: (0, n)),   # W (whole K)
            pl.BlockSpec((1, tn), lambda m, n: (0, n)),    # bias row
        ]
        out_spec = pl.BlockSpec((tm, tn), lambda m, n: (m, n))
        scratch = []
        semantics = ("parallel", "parallel")
        if has_res:
            rp = jnp.pad(residual.astype(jnp.bfloat16),
                         ((0, Mp - M), (0, Np - n_out)))
            in_specs.append(pl.BlockSpec((tm, tn), lambda m, n: (m, n)))
            args.append(rp)
            kern = functools.partial(_mm_whole_res_kernel, act=act)
        else:
            kern = functools.partial(_mm_whole_kernel, act=act)
    else:
        grid = (Mp // tm, Np // tn, Kp // tk)
        in_specs = [
            pl.BlockSpec((tm, tk), lambda m, n, k: (m, k)),
            pl.BlockSpec((tk, tn), lambda m, n, k: (k, n)),
            pl.BlockSpec((1, tn), lambda m, n, k: (0, n)),
        ]
        out_spec = pl.BlockSpec((tm, tn), lambda m, n, k: (m, n))
        scratch = [pltpu.VMEM((tm, tn), jnp.float32)]
        semantics = ("parallel", "parallel", "arbitrary")
        if has_res:
            rp = jnp.pad(residual.astype(jnp.bfloat16),
                         ((0, Mp - M), (0, Np - n_out)))
            in_specs.append(pl.BlockSpec((tm, tn), lambda m, n, k: (m, n)))
            args.append(rp)
            kern = functools.partial(_mm_acc_res_kernel, act=act)
        else:
            kern = functools.partial(_mm_acc_kernel, act=act)

    out = pl.pallas_call(
        kern,
        out_shape=jax.ShapeDtypeStruct((Mp, Np), out_dtype),
        grid_spec=pltpu.PrefetchScalarGridSpec(
            num_scalar_prefetch=0,
            grid=grid,
            in_specs=in_specs,
            out_specs=out_spec,
            scratch_shapes=scratch,
        ),
        compiler_params=pltpu.CompilerParams(
            dimension_semantics=semantics,
            vmem_limit_bytes=vmem_limit,
        ),
    )(*args)
    return out[:M, :n_out]


# ----------------------------------------------------------------------------
# Fused 1x1-spatial tail: flow encoders whose spatial output collapsed to 1x1
# (reduced to dense matmuls) + the 3-layer FF head, in ONE pallas_call with
# all weights VMEM-resident and chained MXU dots.
# ----------------------------------------------------------------------------
def _fused_chain_kernel(*refs, acts):
    x_ref, o_ref = refs[0], refs[-1]
    w_refs = refs[1:-1:2]
    b_refs = refs[2:-1:2]
    h = x_ref[...]
    for w_ref, b_ref, act in zip(w_refs, b_refs, acts):
        y = jnp.dot(h.astype(w_ref.dtype), w_ref[...],
                    preferred_element_type=jnp.float32)
        h = _apply_act(y + b_ref[...], act)
    o_ref[...] = h.astype(o_ref.dtype)


def apply_flow_tail(tail, x2d):
    M, K = x2d.shape
    assert K == tail["d_in"]
    Mp = _round_up(max(M, 16), 16)
    Kp = tail["k_pad"]
    xp = jnp.pad(x2d.astype(jnp.bfloat16), ((0, Mp - M), (0, Kp - K)))
    acts = tuple(a for (_, _, a) in tail["layers"])
    args = [xp]
    for (w, b, _) in tail["layers"]:
        args += [w, b]
    out = pl.pallas_call(
        functools.partial(_fused_chain_kernel, acts=acts),
        out_shape=jax.ShapeDtypeStruct((Mp, tail["p_out"]), jnp.float32),
    )(*args)
    return out[:M, :tail["d_out"]]


# ----------------------------------------------------------------------------
# Conv2d = im2col (small JAX indexing glue) + fused Pallas matmul kernel.
# TODO(synk): im2col is not fused into the matmul kernel; at the test size the
# patch tensor is negligible next to weight traffic (matters at large H/W).
# ----------------------------------------------------------------------------
def _im2col(x, kh, kw, stride, pad):
    # x: NHWC
    N, H, W, C = x.shape
    Ho = (H + 2 * pad - kh) // stride + 1
    Wo = (W + 2 * pad - kw) // stride + 1
    xp = jnp.pad(x, ((0, 0), (pad, pad), (pad, pad), (0, 0)))
    cols = []
    for i in range(kh):
        for j in range(kw):
            patch = lax.slice(
                xp,
                (0, i, j, 0),
                (N, i + (Ho - 1) * stride + 1, j + (Wo - 1) * stride + 1, C),
                (1, stride, stride, 1))
            cols.append(patch)                      # (N, Ho, Wo, C)
    patches = jnp.stack(cols, axis=3)               # (N, Ho, Wo, kh*kw, C)
    return patches.reshape(N * Ho * Wo, kh * kw * C), (N, Ho, Wo)


def apply_conv(layer, x, residual=None):
    N, H, W, C = x.shape
    if layer["mode"] == "flat":
        # Output is 1x1 and the padded window covers the whole input: the conv
        # reduces exactly to a dense matmul against the sliced valid taps.
        patches = x.reshape(N, H * W * C).astype(jnp.bfloat16)
        Ho, Wo = 1, 1
    else:
        patches, (N, Ho, Wo) = _im2col(
            x.astype(jnp.bfloat16), layer["kh"], layer["kw"],
            layer["stride"], layer["pad"])
    assert patches.shape[1] == layer["K"]
    res_mat = None
    if residual is not None:
        res_mat = residual.reshape(N * Ho * Wo, layer["cout"])
    out = matmul_prepped(patches, layer["w"], layer["b"], layer["cout"],
                         act=layer["act"], residual=res_mat)
    return out.reshape(N, Ho, Wo, layer["cout"])


# ----------------------------------------------------------------------------
# Model: parameters + one-time weight preparation + forward
# ----------------------------------------------------------------------------
NUM_BINS = 4                 # input channels
BASE_NUM_CHANNELS = 256
CHANNEL_MULTIPLIER = 2
NUM_ENCODERS = 1             # max_num_channels = 256 * 2 = 512 (flow module needs 512)
NUM_RESIDUAL_BLOCKS = 1
NUM_MOTION_MODELS = 2
KERNEL_SIZE = 5
MAX_NUM_CHANNELS = BASE_NUM_CHANNELS * CHANNEL_MULTIPLIER ** NUM_ENCODERS  # 512
FF_SIZES = [512, 256, 64, 6 * NUM_MOTION_MODELS]


def _init_conv(key, kh, kw, cin, cout):
    kw_, kb_ = jax.random.split(key)
    w = jax.random.normal(kw_, (kh, kw, cin, cout), jnp.float32) / np.sqrt(kh * kw * cin)
    b = jax.random.normal(kb_, (cout,), jnp.float32) * 0.01
    return w, b


def _init_linear(key, fin, fout):
    kw_, kb_ = jax.random.split(key)
    w = jax.random.normal(kw_, (fin, fout), jnp.float32) / np.sqrt(fin)
    b = jax.random.normal(kb_, (fout,), jnp.float32) * 0.01
    return w, b


def init_params(key):
    params = {"encoders": [], "resblocks": [], "flow_encoders": [], "ff": []}
    enc_in = [NUM_BINS]
    enc_out = [BASE_NUM_CHANNELS * CHANNEL_MULTIPLIER ** (i + 1)
               for i in range(NUM_ENCODERS)]
    for i in range(1, NUM_ENCODERS):
        enc_in.append(BASE_NUM_CHANNELS * CHANNEL_MULTIPLIER ** i)

    keys = jax.random.split(key, NUM_ENCODERS + 2 * NUM_RESIDUAL_BLOCKS + 6 + 3)
    ki = 0
    for cin, cout in zip(enc_in, enc_out):
        params["encoders"].append(
            _init_conv(keys[ki], KERNEL_SIZE, KERNEL_SIZE, cin, cout)); ki += 1
    for _ in range(NUM_RESIDUAL_BLOCKS):
        w1, b1 = _init_conv(keys[ki], 3, 3, MAX_NUM_CHANNELS, MAX_NUM_CHANNELS); ki += 1
        w2, b2 = _init_conv(keys[ki], 3, 3, MAX_NUM_CHANNELS, MAX_NUM_CHANNELS); ki += 1
        params["resblocks"].append({"w1": w1, "b1": b1, "w2": w2, "b2": b2})
    for _ in range(6):   # build_encoders_optical_flow_module: 6 x ConvLayer(512,512,k,s=2)
        params["flow_encoders"].append(
            _init_conv(keys[ki], KERNEL_SIZE, KERNEL_SIZE, 512, 512)); ki += 1
    for fin, fout in zip(FF_SIZES[:-1], FF_SIZES[1:]):
        params["ff"].append(_init_linear(keys[ki], fin, fout)); ki += 1
    return params


def _prep_conv(w_hwio, b, in_hw, stride, act):
    """Pad/reshape/cast one conv layer's weights once (bf16, MXU-ready)."""
    kh, kw, cin, cout = w_hwio.shape
    pad = kh // 2
    H, W = in_hw
    Ho = (H + 2 * pad - kh) // stride + 1
    Wo = (W + 2 * pad - kw) // stride + 1
    # Degenerate case: single output pixel whose padded window covers the whole
    # input -> only taps [pad:pad+H, pad:pad+W] ever touch real data (exact
    # algebraic identity; the other taps only multiply zero padding).
    flat = (Ho == 1 and Wo == 1 and H <= kh - pad and W <= kw - pad)
    if flat:
        # Guard the algebraic reduction's preconditions (symmetric 'same' pad,
        # single window starting at -pad fully covering the real input).
        assert pad == kh // 2 and pad == kw // 2
        assert H <= kh - pad and W <= kw - pad and Ho == 1 and Wo == 1
        w_eff = w_hwio[pad:pad + H, pad:pad + W]
        K = H * W * cin
        w_mat = w_eff.reshape(K, cout)
    else:
        K = kh * kw * cin
        w_mat = w_hwio.reshape(K, cout)
    Kp = _round_up(K, 128)
    Np = _round_up(max(cout, 128), 128)
    wp = jnp.zeros((Kp, Np), jnp.bfloat16).at[:K, :cout].set(
        w_mat.astype(jnp.bfloat16))
    bp = jnp.zeros((1, Np), jnp.float32).at[0, :cout].set(
        b.astype(jnp.float32))
    layer = dict(mode="flat" if flat else "im2col", kh=kh, kw=kw, pad=pad,
                 stride=stride, cout=cout, act=act, K=K, w=wp, b=bp)
    return layer, (Ho, Wo)


def _prep_ff(ff_params):
    (w1, b1), (w2, b2), (w3, b3) = ff_params
    d0, d1 = w1.shape
    d2 = w2.shape[1]
    d3 = w3.shape[1]
    p1 = _round_up(max(d1, 128), 128)
    p2 = _round_up(max(d2, 128), 128)
    p3 = _round_up(max(d3, 128), 128)
    W1 = jnp.zeros((d0, p1), jnp.bfloat16).at[:, :d1].set(w1.astype(jnp.bfloat16))
    W2 = jnp.zeros((p1, p2), jnp.bfloat16).at[:d1, :d2].set(w2.astype(jnp.bfloat16))
    W3 = jnp.zeros((p2, p3), jnp.bfloat16).at[:d2, :d3].set(w3.astype(jnp.bfloat16))
    B1 = jnp.zeros((1, p1), jnp.float32).at[0, :d1].set(b1.astype(jnp.float32))
    B2 = jnp.zeros((1, p2), jnp.float32).at[0, :d2].set(b2.astype(jnp.float32))
    B3 = jnp.zeros((1, p3), jnp.float32).at[0, :d3].set(b3.astype(jnp.float32))
    return dict(w1=W1, b1=B1, w2=W2, b2=B2, w3=W3, b3=B3,
                d_in=d0, d_out=d3, p_out=p3)


def _prep_tail(flat_layers, ff_params):
    """Fused tail = flat (1x1-spatial) flow encoders + the 3-layer FF head."""
    ffp = _prep_ff(ff_params)
    layers = [(l["w"], l["b"], l["act"]) for l in flat_layers]
    layers.append((ffp["w1"], ffp["b1"], "tanh"))
    layers.append((ffp["w2"], ffp["b2"], "tanh"))
    layers.append((ffp["w3"], ffp["b3"], None))
    for (wa, _, _), (wb_, _, _) in zip(layers[:-1], layers[1:]):
        assert wa.shape[1] == wb_.shape[0]          # padded dims must chain
    d_in = flat_layers[0]["K"] if flat_layers else ffp["d_in"]
    return dict(layers=layers, d_in=d_in, k_pad=layers[0][0].shape[0],
                d_out=ffp["d_out"], p_out=ffp["p_out"])


def prepare_params(params, input_hw):
    """One-time weight preprocessing (shapes are static for a given input HW)."""
    prep = {"encoders": [], "resblocks": []}
    hw = tuple(input_hw)
    for (w, b) in params["encoders"]:
        layer, hw = _prep_conv(w, b, hw, stride=2, act="relu")
        prep["encoders"].append(layer)
    for rb in params["resblocks"]:
        c1, hw = _prep_conv(rb["w1"], rb["b1"], hw, stride=1, act="relu")
        c2, hw = _prep_conv(rb["w2"], rb["b2"], hw, stride=1, act="relu")
        prep["resblocks"].append({"c1": c1, "c2": c2})
    flow_layers = []
    for (w, b) in params["flow_encoders"]:
        layer, hw = _prep_conv(w, b, hw, stride=2, act="leaky_relu")
        flow_layers.append(layer)
    # Split flow encoders into a streamed prefix (im2col + whole-K matmul) and
    # a fused 1x1-spatial suffix merged with the FF head into one kernel.
    split = len(flow_layers)
    for i in range(len(flow_layers)):
        if all(l["mode"] == "flat" for l in flow_layers[i:]):
            split = i
            break
    prep["flow_encoders"] = flow_layers[:split]
    prep["flow_tail"] = _prep_tail(flow_layers[split:], params["ff"])
    return prep


def forward(prep, x_nchw, num_motion_models=NUM_MOTION_MODELS):
    x = jnp.transpose(x_nchw, (0, 2, 3, 1)).astype(jnp.float32)  # NCHW -> NHWC

    # encoders (ConvLayer, stride 2, relu)
    for layer in prep["encoders"]:
        x = apply_conv(layer, x)

    # residual blocks: x,_ = resblock(x)  (conv3x3+relu, conv3x3 + skip, relu)
    for rb in prep["resblocks"]:
        h = apply_conv(rb["c1"], x)
        x = apply_conv(rb["c2"], h, residual=x)

    # optical-flow encoders with spatial extent left (im2col + whole-K matmul)
    xf = x
    for layer in prep["flow_encoders"]:
        xf = apply_conv(layer, xf)

    # fused tail: remaining (1x1-spatial) flow encoders + FF head, one kernel
    N = xf.shape[0]
    out = apply_flow_tail(prep["flow_tail"], xf.reshape(N, -1))
    return {"motion models": out.reshape(N, num_motion_models, 2, 3)}


# ----------------------------------------------------------------------------
# Pure-JAX reference (f32 lax.conv) for a correctness sanity check.
# ----------------------------------------------------------------------------
def _ref_conv(x, w, b, stride, act=None, residual=None):
    pad = w.shape[0] // 2
    y = lax.conv_general_dilated(
        x, w, (stride, stride), ((pad, pad), (pad, pad)),
        dimension_numbers=("NHWC", "HWIO", "NHWC"))
    y = y + b[None, None, None, :]
    if residual is not None:
        y = y + residual
    return _apply_act(y, act)


def forward_ref(params, x_nchw):
    x = jnp.transpose(x_nchw, (0, 2, 3, 1))
    for (w, b) in params["encoders"]:
        x = _ref_conv(x, w, b, 2, "relu")
    for rb in params["resblocks"]:
        h = _ref_conv(x, rb["w1"], rb["b1"], 1, "relu")
        x = _ref_conv(h, rb["w2"], rb["b2"], 1, "relu", residual=x)
    xf = x
    for (w, b) in params["flow_encoders"]:
        xf = _ref_conv(xf, w, b, 2, "leaky_relu")
    N = xf.shape[0]
    xf = xf.reshape(N, -1)
    n_ff = len(params["ff"])
    for i, (w, b) in enumerate(params["ff"]):
        xf = xf @ w + b
        if i != n_ff - 1:
            xf = jnp.tanh(xf)
    return xf.reshape(N, NUM_MOTION_MODELS, 2, 3)


# TODO(synk): decoders / segmentation branch and the 'leaky_dorelu' activation
# are built in __init__ but never used by forward(), so they are omitted.

if __name__ == "__main__":
    key = jax.random.PRNGKey(0)
    pkey, xkey = jax.random.split(key)
    params = init_params(pkey)

    # x: N x num_bins x H x W  (NCHW, as in the PyTorch module)
    x = jax.random.normal(xkey, (2, NUM_BINS, 16, 16), jnp.float32)

    prep = prepare_params(params, (16, 16))     # one-time bf16 weight prep
    out = forward(prep, x)
    flow = jax.block_until_ready(out["motion models"])
    assert flow.shape == (2, NUM_MOTION_MODELS, 2, 3)

    ref = jax.block_until_ready(forward_ref(params, x))
    np.testing.assert_allclose(np.asarray(flow), np.asarray(ref),
                               rtol=5e-2, atol=5e-2)

    print("KERNEL_OK")
</pallas_src>

<mosaic_0001>
module attributes {stable_mosaic.version = 11 : i64} {
  func.func @_mm_whole_kernel(%arg0: i32, %arg1: i32, %arg2: memref<128x128xbf16, #tpu.memory_space<vmem>>, %arg3: memref<128x512xbf16, #tpu.memory_space<vmem>>, %arg4: memref<1x512xf32, #tpu.memory_space<vmem>>, %arg5: memref<128x512xbf16, #tpu.memory_space<vmem>>) attributes {dimension_semantics = [#tpu.dimension_semantics<parallel>, #tpu.dimension_semantics<parallel>], iteration_bounds = array<i64: 1, 1>, scalar_prefetch = 0 : i64, scratch_operands = 0 : i64, tpu.core_type = #tpu.core_type<tc>, window_params = [{transform_indices = @transform_0, window_bounds = array<i64: 128, 128>}, {transform_indices = @transform_1, window_bounds = array<i64: 128, 512>}, {transform_indices = @transform_2, window_bounds = array<i64: 1, 512>}, {transform_indices = @transform_3, window_bounds = array<i64: 128, 512>}]} {
    %c0 = arith.constant 0 : index
    %c0_0 = arith.constant 0 : index
    %0 = vector.load %arg2[%c0, %c0_0] : memref<128x128xbf16, #tpu.memory_space<vmem>>, vector<128x128xbf16>
    %c0_1 = arith.constant 0 : index
    %c0_2 = arith.constant 0 : index
    %1 = vector.load %arg3[%c0_1, %c0_2] : memref<128x512xbf16, #tpu.memory_space<vmem>>, vector<128x512xbf16>
    %cst = arith.constant dense<0.000000e+00> : vector<128x512xf32>
    %2 = tpu.matmul %0, %1, %cst {dimension_numbers = #tpu.dot_dimension_numbers<[1], [0], [0], [1], [0, 0, 1, 1], [], []>} : vector<128x128xbf16>, vector<128x512xbf16>, vector<128x512xf32> -> vector<128x512xf32>
    %c0_3 = arith.constant 0 : index
    %c0_4 = arith.constant 0 : index
    %3 = vector.load %arg4[%c0_3, %c0_4] : memref<1x512xf32, #tpu.memory_space<vmem>>, vector<1x512xf32>
    %4 = vector.broadcast %3 : vector<1x512xf32> to vector<128x512xf32>
    %5 = arith.addf %2, %4 : vector<128x512xf32>
    %cst_5 = arith.constant 0.000000e+00 : f32
    %6 = vector.broadcast %cst_5 : f32 to vector<128x512xf32>
    %7 = arith.maximumf %5, %6 : vector<128x512xf32>
    %8 = arith.truncf %7 : vector<128x512xf32> to vector<128x512xbf16>
    %c0_6 = arith.constant 0 : index
    %c0_7 = arith.constant 0 : index
    %9 = vector.load %arg5[%c0_6, %c0_7] : memref<128x512xbf16, #tpu.memory_space<vmem>>, vector<128x512xbf16>
    tpu.vector_store %arg5[%c0_6, %c0_7], %8 {strides = array<i32>} : memref<128x512xbf16, #tpu.memory_space<vmem>>, vector<128x512xbf16>,
    return
  }
  func.func @transform_0(%arg0: i32, %arg1: i32) -> (i32, i32) {
    %c0_i32 = arith.constant 0 : i32
    %c0_i32_0 = arith.constant 0 : i32
    return %arg0, %c0_i32 : i32, i32
  }
  func.func @transform_1(%arg0: i32, %arg1: i32) -> (i32, i32) {
    %c0_i32 = arith.constant 0 : i32
    %c0_i32_0 = arith.constant 0 : i32
    return %c0_i32, %arg1 : i32, i32
  }
  func.func @transform_2(%arg0: i32, %arg1: i32) -> (i32, i32) {
    %c0_i32 = arith.constant 0 : i32
    %c0_i32_0 = arith.constant 0 : i32
    return %c0_i32, %arg1 : i32, i32
  }
  func.func @transform_3(%arg0: i32, %arg1: i32) -> (i32, i32) {
    %c0_i32 = arith.constant 0 : i32
    return %arg0, %arg1 : i32, i32
  }
}

</mosaic_0001>

<llo_original>
// kernel: tpu_custom_call.1
$region0: #{tpu_custom_call.1}
  #allocation0 [shape = 'u32[]', space=smem, size = 0x4, offset = 0x4, fixed_abs, tag = 'smem constant byte address 0x4 - core index']
  #allocation1 [shape = 'u32[144,128]{1,0:T(1,128)}', space=vmem, size = 0x12000, scoped, tag = 'internal scratch']
  %s0 = inlined_call_operand.hbm [shape: bf16[128,128], index: 0, kind: input, shape index: {}]
  %s1 = inlined_call_operand.hbm [shape: bf16[128,512], index: 1, kind: input, shape index: {}]
  %s2 = inlined_call_operand.hbm [shape: f32[1,512], index: 2, kind: input, shape index: {}]
  %s3 = inlined_call_operand.hbm [shape: bf16[128,512], index: 3, kind: output, shape index: {}]
  %s4 = sld [smem:[#allocation0]]
  $region34: #{tpu_custom_call.1} parent=0
    _
  %s6 = ssub.s32 1, %s4
  %s7 = scalar_select 0, %s6, %s4
  $region1: #{tpu_custom_call.1} parent=0
    #allocation2 [shape = 'u8[32768]{0}', space=vmem, size = 0x8000, scoped, tag = 'input window, operand 0, single buffered']
    #allocation3 [shape = 's32[1]{0}', space=sflag, size = 0x4, scoped, tag = 'scoped memory for tpu_custom_call.1']
    #allocation4 [shape = 's32[1]{0}', space=sflag, size = 0x4, scoped, tag = 'scoped memory for tpu_custom_call.1']
    #allocation5 [shape = 'u8[131072]{0}', space=vmem, size = 0x20000, scoped, tag = 'input window, operand 1, single buffered']
    #allocation6 [shape = 's32[1]{0}', space=sflag, size = 0x4, scoped, tag = 'scoped memory for tpu_custom_call.1']
    #allocation7 [shape = 'u8[2048]{0}', space=vmem, size = 0x800, scoped, tag = 'input window, operand 2, single buffered']
    #allocation8 [shape = 'u8[131072]{0}', space=vmem, size = 0x20000, scoped, tag = 'output window, operand 0, single buffered']
    %8 = vsyncpa [#allocation3], 0
    %9 = vsyncpa [#allocation6], 0
    %10 = vsyncpa [#allocation4], 0
    // Predicated region
    $region2: #{tpu_custom_call.1} parent=1 // pred_check
      _
    $region3: #{tpu_custom_call.1} parent=1 // pred_check_branch
      %12 = sbr.rel (0) target = $region5
    $region4: #{tpu_custom_call.1} parent=1 // pred_region
      %s14 = ssub.s32 1024, 1024
      %15 = vsyncadd [#allocation3], %s14
      %s16 = sshll.u32 [#allocation2], 4
      %s17 = int_to_ptr.vmem [resolvable:$true] %s16
      %22 = dma.hbm_to_vmem [thread:$0]  %s0, 1024, %s17, [#allocation3], 64, 64, 4
    $region5: #{tpu_custom_call.1} parent=1 // pred_fallthru
      _
    // Predicated region
    $region6: #{tpu_custom_call.1} parent=1 // pred_check
      _
    $region7: #{tpu_custom_call.1} parent=1 // pred_check_branch
      %24 = sbr.rel (0) target = $region9
    $region8: #{tpu_custom_call.1} parent=1 // pred_region
      %s26 = ssub.s32 4096, 4096
      %27 = vsyncadd [#allocation6], %s26
      %s28 = sshll.u32 [#allocation5], 4
      %s29 = int_to_ptr.vmem [resolvable:$true] %s28
      %34 = dma.hbm_to_vmem [thread:$0]  %s1, 4096, %s29, [#allocation6], 256, 256, 16
    $region9: #{tpu_custom_call.1} parent=1 // pred_fallthru
      _
    // Predicated region
    $region10: #{tpu_custom_call.1} parent=1 // pred_check
      _
    $region11: #{tpu_custom_call.1} parent=1 // pred_check_branch
      %36 = sbr.rel (0) target = $region13
    $region12: #{tpu_custom_call.1} parent=1 // pred_region
      %s38 = ssub.s32 64, 64
      %39 = vsyncadd [#allocation6], %s38
      %s41 = sshll.u32 [#allocation7], 4
      %s42 = int_to_ptr.vmem [resolvable:$true] %s41
      %44 = dma.hbm_to_vmem [thread:$0]  %s2, 64, %s42, [#allocation6]
    $region13: #{tpu_custom_call.1} parent=1 // pred_fallthru
      _
    // Predicated region
    $region14: #{tpu_custom_call.1} parent=1 // pred_check
      _
    $region15: #{tpu_custom_call.1} parent=1 // pred_check_branch
      %46 = sbr.rel (0) target = $region17
    $region16: #{tpu_custom_call.1} parent=1 // pred_region
      %47 = dma.done [#allocation3], 1024
    $region17: #{tpu_custom_call.1} parent=1 // pred_fallthru
      _
    // Predicated region
    $region18: #{tpu_custom_call.1} parent=1 // pred_check
      _
    $region19: #{tpu_custom_call.1} parent=1 // pred_check_branch
      %49 = sbr.rel (0) target = $region21
    $region20: #{tpu_custom_call.1} parent=1 // pred_region
      %50 = dma.done [#allocation6], 4096
    $region21: #{tpu_custom_call.1} parent=1 // pred_fallthru
      _
    // Predicated region
    $region22: #{tpu_custom_call.1} parent=1 // pred_check
      _
    $region23: #{tpu_custom_call.1} parent=1 // pred_check_branch
      %52 = sbr.rel (0) target = $region25
    $region24: #{tpu_custom_call.1} parent=1 // pred_region
      %53 = dma.done [#allocation6], 64
    $region25: #{tpu_custom_call.1} parent=1 // pred_fallthru
      _
    %v55 = vld [vmem:[#allocation2] sm:$0xf]
    %v56 = vld [vmem:[#allocation2 + $0x4] sm:$0xf]
    %v57 = vld [vmem:[#allocation2 + $0x8] sm:$0xf]
    %v58 = vld [vmem:[#allocation2 + $0xc] sm:$0xf]
    %v59 = vld [vmem:[#allocation2 + $0x10] sm:$0xf]
    %v60 = vld [vmem:[#allocation2 + $0x14] sm:$0xf]
    %v61 = vld [vmem:[#allocation2 + $0x18] sm:$0xf]
    %v62 = vld [vmem:[#allocation2 + $0x1c] sm:$0xf]
    %v63 = vld [vmem:[#allocation2 + $0x20] sm:$0xf]
    %v64 = vld [vmem:[#allocation2 + $0x24] sm:$0xf]
    %v65 = vld [vmem:[#allocation2 + $0x28] sm:$0xf]
    %v66 = vld [vmem:[#allocation2 + $0x2c] sm:$0xf]
    %v67 = vld [vmem:[#allocation2 + $0x30] sm:$0xf]
    %v68 = vld [vmem:[#allocation2 + $0x34] sm:$0xf]
    %v69 = vld [vmem:[#allocation2 + $0x38] sm:$0xf]
    %v70 = vld [vmem:[#allocation2 + $0x3c] sm:$0xf]
    %v71 = vld [vmem:[#allocation5] sm:$0xff]
    %v72 = vld [vmem:[#allocation5 + $0x8] sm:$0xff]
    %v73 = vld [vmem:[#allocation5 + $0x10] sm:$0xff]
    %v74 = vld [vmem:[#allocation5 + $0x18] sm:$0xff]
    %v75 = vld [vmem:[#allocation5 + $0x20] sm:$0xff]
    %v76 = vld [vmem:[#allocation5 + $0x28] sm:$0xff]
    %v77 = vld [vmem:[#allocation5 + $0x30] sm:$0xff]
    %v78 = vld [vmem:[#allocation5 + $0x38] sm:$0xff]
    %v79 = vld [vmem:[#allocation5 + $0x40] sm:$0xff]
    %v80 = vld [vmem:[#allocation5 + $0x48] sm:$0xff]
    %v81 = vld [vmem:[#allocation5 + $0x50] sm:$0xff]
    %v82 = vld [vmem:[#allocation5 + $0x58] sm:$0xff]
    %v83 = vld [vmem:[#allocation5 + $0x60] sm:$0xff]
    %v84 = vld [vmem:[#allocation5 + $0x68] sm:$0xff]
    %v85 = vld [vmem:[#allocation5 + $0x70] sm:$0xff]
    %v86 = vld [vmem:[#allocation5 + $0x78] sm:$0xff]
    %v87 = vld [vmem:[#allocation5 + $0x80] sm:$0xff]
    %v88 = vld [vmem:[#allocation5 + $0x88] sm:$0xff]
    %v89 = vld [vmem:[#allocation5 + $0x90] sm:$0xff]
    %v90 = vld [vmem:[#allocation5 + $0x98] sm:$0xff]
    %v91 = vld [vmem:[#allocation5 + $0xa0] sm:$0xff]
    %v92 = vld [vmem:[#allocation5 + $0xa8] sm:$0xff]
    %v93 = vld [vmem:[#allocation5 + $0xb0] sm:$0xff]
    %v94 = vld [vmem:[#allocation5 + $0xb8] sm:$0xff]
    %v95 = vld [vmem:[#allocation5 + $0xc0] sm:$0xff]
    %v96 = vld [vmem:[#allocation5 + $0xc8] sm:$0xff]
    %v97 = vld [vmem:[#allocation5 + $0xd0] sm:$0xff]
    %v98 = vld [vmem:[#allocation5 + $0xd8] sm:$0xff]
    %v99 = vld [vmem:[#allocation5 + $0xe0] sm:$0xff]
    %v100 = vld [vmem:[#allocation5 + $0xe8] sm:$0xff]
    %v101 = vld [vmem:[#allocation5 + $0xf0] sm:$0xff]
    %v102 = vld [vmem:[#allocation5 + $0xf8] sm:$0xff]
    %v103 = vld [vmem:[#allocation7] sm:$0xf]
    %v105 = vlaneseq
    %v106 = vshrl.u32 %v105, 7
    %v107 = vsub.s32 0, %v106
    %v108 = vrot.slane %v103, %v107
    %v109 = vlaneseq
    %v110 = vshrl.u32 %v109, 7
    %v111 = vsub.s32 1, %v110
    %v112 = vrot.slane %v103, %v111
    %v113 = vlaneseq
    %v114 = vshrl.u32 %v113, 7
    %v115 = vsub.s32 2, %v114
    %v116 = vrot.slane %v103, %v115
    %v117 = vlaneseq
    %v118 = vshrl.u32 %v117, 7
    %v119 = vsub.s32 3, %v118
    %v120 = vrot.slane %v103, %v119
    %v141 = vunpack.c.l.b16 %v55
    %v142 = vunpack.c.l.b16 %v56
    %v143 = vunpack.c.l.b16 %v57
    %v144 = vunpack.c.l.b16 %v58
    %v145 = vunpack.c.l.b16 %v59
    %v146 = vunpack.c.l.b16 %v60
    %v147 = vunpack.c.l.b16 %v61
    %v148 = vunpack.c.l.b16 %v62
    %v149 = vunpack.c.l.b16 %v63
    %v150 = vunpack.c.l.b16 %v64
    %v151 = vunpack.c.l.b16 %v65
    %v152 = vunpack.c.l.b16 %v66
    %v153 = vunpack.c.l.b16 %v67
    %v154 = vunpack.c.l.b16 %v68
    %v155 = vunpack.c.l.b16 %v69
    %v156 = vunpack.c.l.b16 %v70
    %v157 = vpack.c.b16 %v142, %v141
    %v158 = vpack.c.b16 %v144, %v143
    %v159 = vpack.c.b16 %v146, %v145
    %v160 = vpack.c.b16 %v148, %v147
    %v161 = vpack.c.b16 %v150, %v149
    %v162 = vpack.c.b16 %v152, %v151
    %v163 = vpack.c.b16 %v154, %v153
    %v164 = vpack.c.b16 %v156, %v155
    %v205 = vunpack.c.l.b16 %v71
    %v206 = vunpack.c.h.b16 %v71
    %v207 = vunpack.c.l.b16 %v72
    %v208 = vunpack.c.h.b16 %v72
    %v209 = vunpack.c.l.b16 %v73
    %v210 = vunpack.c.h.b16 %v73
    %v211 = vunpack.c.l.b16 %v74
    %v212 = vunpack.c.h.b16 %v74
    %v213 = vunpack.c.l.b16 %v75
    %v214 = vunpack.c.h.b16 %v75
    %v215 = vunpack.c.l.b16 %v76
    %v216 = vunpack.c.h.b16 %v76
    %v217 = vunpack.c.l.b16 %v77
    %v218 = vunpack.c.h.b16 %v77
    %v219 = vunpack.c.l.b16 %v78
    %v220 = vunpack.c.h.b16 %v78
    %v221 = vunpack.c.l.b16 %v79
    %v222 = vunpack.c.h.b16 %v79
    %v223 = vunpack.c.l.b16 %v80
    %v224 = vunpack.c.h.b16 %v80
    %v225 = vunpack.c.l.b16 %v81
    %v226 = vunpack.c.h.b16 %v81
    %v227 = vunpack.c.l.b16 %v82
    %v228 = vunpack.c.h.b16 %v82
    %v229 = vunpack.c.l.b16 %v83
    %v230 = vunpack.c.h.b16 %v83
    %v231 = vunpack.c.l.b16 %v84
    %v232 = vunpack.c.h.b16 %v84
    %v233 = vunpack.c.l.b16 %v85
    %v234 = vunpack.c.h.b16 %v85
    %v235 = vunpack.c.l.b16 %v86
    %v236 = vunpack.c.h.b16 %v86
    %v237 = vunpack.c.l.b16 %v87
    %v238 = vunpack.c.h.b16 %v87
    %v239 = vunpack.c.l.b16 %v88
    %v240 = vunpack.c.h.b16 %v88
    %v241 = vunpack.c.l.b16 %v89
    %v242 = vunpack.c.h.b16 %v89
    %v243 = vunpack.c.l.b16 %v90
    %v244 = vunpack.c.h.b16 %v90
    %v245 = vunpack.c.l.b16 %v91
    %v246 = vunpack.c.h.b16 %v91
    %v247 = vunpack.c.l.b16 %v92
    %v248 = vunpack.c.h.b16 %v92
    %v249 = vunpack.c.l.b16 %v93
    %v250 = vunpack.c.h.b16 %v93
    %v251 = vunpack.c.l.b16 %v94
    %v252 = vunpack.c.h.b16 %v94
    %v253 = vunpack.c.l.b16 %v95
    %v254 = vunpack.c.h.b16 %v95
    %v255 = vunpack.c.l.b16 %v96
    %v256 = vunpack.c.h.b16 %v96
    %v257 = vunpack.c.l.b16 %v97
    %v258 = vunpack.c.h.b16 %v97
    %v259 = vunpack.c.l.b16 %v98
    %v260 = vunpack.c.h.b16 %v98
    %v261 = vunpack.c.l.b16 %v99
    %v262 = vunpack.c.h.b16 %v99
    %v263 = vunpack.c.l.b16 %v100
    %v264 = vunpack.c.h.b16 %v100
    %v265 = vunpack.c.l.b16 %v101
    %v266 = vunpack.c.h.b16 %v101
    %v267 = vunpack.c.l.b16 %v102
    %v268 = vunpack.c.h.b16 %v102
    %v269 = vpack.c.b16 %v209, %v205
    %v270 = vpack.c.b16 %v210, %v206
    %v271 = vpack.c.b16 %v211, %v207
    %v272 = vpack.c.b16 %v212, %v208
    %v273 = vpack.c.b16 %v217, %v213
    %v274 = vpack.c.b16 %v218, %v214
    %v275 = vpack.c.b16 %v219, %v215
    %v276 = vpack.c.b16 %v220, %v216
    %v277 = vpack.c.b16 %v225, %v221
    %v278 = vpack.c.b16 %v226, %v222
    %v279 = vpack.c.b16 %v227, %v223
    %v280 = vpack.c.b16 %v228, %v224
    %v281 = vpack.c.b16 %v233, %v229
    %v282 = vpack.c.b16 %v234, %v230
    %v283 = vpack.c.b16 %v235, %v231
    %v284 = vpack.c.b16 %v236, %v232
    %v285 = vpack.c.b16 %v241, %v237
    %v286 = vpack.c.b16 %v242, %v238
    %v287 = vpack.c.b16 %v243, %v239
    %v288 = vpack.c.b16 %v244, %v240
    %v289 = vpack.c.b16 %v249, %v245
    %v290 = vpack.c.b16 %v250, %v246
    %v291 = vpack.c.b16 %v251, %v247
    %v292 = vpack.c.b16 %v252, %v248
    %v293 = vpack.c.b16 %v257, %v253
    %v294 = vpack.c.b16 %v258, %v254
    %v295 = vpack.c.b16 %v259, %v255
    %v296 = vpack.c.b16 %v260, %v256
    %v297 = vpack.c.b16 %v265, %v261
    %v298 = vpack.c.b16 %v266, %v262
    %v299 = vpack.c.b16 %v267, %v263
    %v300 = vpack.c.b16 %v268, %v264
    %333 = vmatprep.subr.bf16.mxu0 %v298
    %334 = vmatpush1.bf16.msra.mxu0 %v297
    %335 = vmatprep.subr.bf16.mxu0 %v294
    %336 = vmatpush1.bf16.msra.mxu0 %v293
    %337 = vmatprep.subr.bf16.mxu0 %v290
    %338 = vmatpush1.bf16.msra.mxu0 %v289
    %339 = vmatprep.subr.bf16.mxu0 %v286
    %340 = vmatpush1.bf16.msra.mxu0 %v285
    %341 = vmatprep.subr.bf16.mxu0 %v282
    %342 = vmatpush1.bf16.msra.mxu0 %v281
    %343 = vmatprep.subr.bf16.mxu0 %v278
    %344 = vmatpush1.bf16.msra.mxu0 %v277
    %345 = vmatprep.subr.bf16.mxu0 %v274
    %346 = vmatpush1.bf16.msra.mxu0 %v273
    %347 = vmatprep.subr.bf16.mxu0 %v270
    %348 = vmatpush1.bf16.msra.mxu0 %v269
    %349 = vmatprep.subr.bf16.mxu0 0
    %350 = vmatpush2.bf16.msra.mxu0 0
    %351 = vmatprep.subr.bf16.mxu0 0
    %352 = vmatpush2.bf16.msra.mxu0 0
    %353 = vmatprep.subr.bf16.mxu0 0
    %354 = vmatpush2.bf16.msra.mxu0 0
    %355 = vmatprep.subr.bf16.mxu0 0
    %356 = vmatpush2.bf16.msra.mxu0 0
    %357 = vmatprep.subr.bf16.mxu0 0
    %358 = vmatpush2.bf16.msra.mxu0 0
    %359 = vmatprep.subr.bf16.mxu0 0
    %360 = vmatpush2.bf16.msra.mxu0 0
    %361 = vmatprep.subr.bf16.mxu0 0
    %362 = vmatpush2.bf16.msra.mxu0 0
    %363 = vmatprep.subr.bf16.mxu0 0
    %364 = vmatpush2.bf16.msra.mxu0 0
    %365 = vmatprep.mubr.bf16.mxu0 0
    %366 = vmatmul.mubr.bf16.gmra.mxu0 %v157
    %v367 = vpop.f32.mrf.mxu0
    %v368 = vadd.f32 %v108, %v367
    %v369 = vpop.f32.mrf.mxu0
    %v370 = vadd.f32 %v112, %v369
    %v371 = vpop.f32.mrf.mxu0
    %v372 = vadd.f32 %v108, %v371
    %v373 = vpop.f32.mrf.mxu0
    %v374 = vadd.f32 %v112, %v373
    %375 = vmatprep.mubr.bf16.mxu0 0
    %376 = vmatmul.mubr.bf16.gmra.mxu0 %v158
    %v377 = vpop.f32.mrf.mxu0
    %v378 = vadd.f32 %v108, %v377
    %v379 = vpop.f32.mrf.mxu0
    %v380 = vadd.f32 %v112, %v379
    %v381 = vpop.f32.mrf.mxu0
    %v382 = vadd.f32 %v108, %v381
    %v383 = vpop.f32.mrf.mxu0
    %v384 = vadd.f32 %v112, %v383
    %385 = vmatprep.mubr.bf16.mxu0 0
    %386 = vmatmul.mubr.bf16.gmra.mxu0 %v159
    %v387 = vpop.f32.mrf.mxu0
    %v388 = vadd.f32 %v108, %v387
    %v389 = vpop.f32.mrf.mxu0
    %v390 = vadd.f32 %v112, %v389
    %v391 = vpop.f32.mrf.mxu0
    %v392 = vadd.f32 %v108, %v391
    %v393 = vpop.f32.mrf.mxu0
    %v394 = vadd.f32 %v112, %v393
    %395 = vmatprep.mubr.bf16.mxu0 0
    %396 = vmatmul.mubr.bf16.gmra.mxu0 %v160
    %v397 = vpop.f32.mrf.mxu0
    %v398 = vadd.f32 %v108, %v397
    %v399 = vpop.f32.mrf.mxu0
    %v400 = vadd.f32 %v112, %v399
    %v401 = vpop.f32.mrf.mxu0
    %v402 = vadd.f32 %v108, %v401
    %v403 = vpop.f32.mrf.mxu0
    %v404 = vadd.f32 %v112, %v403
    %405 = vmatprep.mubr.bf16.mxu0 0
    %406 = vmatmul.mubr.bf16.gmra.mxu0 %v161
    %v407 = vpop.f32.mrf.mxu0
    %v408 = vadd.f32 %v108, %v407
    %v409 = vpop.f32.mrf.mxu0
    %v410 = vadd.f32 %v112, %v409
    %v411 = vpop.f32.mrf.mxu0
    %v412 = vadd.f32 %v108, %v411
    %v413 = vpop.f32.mrf.mxu0
    %v414 = vadd.f32 %v112, %v413
    %415 = vmatprep.mubr.bf16.mxu0 0
    %416 = vmatmul.mubr.bf16.gmra.mxu0 %v162
    %v417 = vpop.f32.mrf.mxu0
    %v418 = vadd.f32 %v108, %v417
    %v419 = vpop.f32.mrf.mxu0
    %v420 = vadd.f32 %v112, %v419
    %v421 = vpop.f32.mrf.mxu0
    %v422 = vadd.f32 %v108, %v421
    %v423 = vpop.f32.mrf.mxu0
    %v424 = vadd.f32 %v112, %v423
    %425 = vmatprep.mubr.bf16.mxu0 0
    %426 = vmatmul.mubr.bf16.gmra.mxu0 %v163
    %v427 = vpop.f32.mrf.mxu0
    %v428 = vadd.f32 %v108, %v427
    %v429 = vpop.f32.mrf.mxu0
    %v430 = vadd.f32 %v112, %v429
    %v431 = vpop.f32.mrf.mxu0
    %v432 = vadd.f32 %v108, %v431
    %v433 = vpop.f32.mrf.mxu0
    %v434 = vadd.f32 %v112, %v433
    %435 = vmatprep.mubr.bf16.mxu0 0
    %436 = vmatmul.mubr.bf16.gmra.mxu0 %v164
    %v437 = vpop.f32.mrf.mxu0
    %v438 = vadd.f32 %v108, %v437
    %v439 = vpop.f32.mrf.mxu0
    %v440 = vadd.f32 %v112, %v439
    %v441 = vpop.f32.mrf.mxu0
    %v442 = vadd.f32 %v108, %v441
    %v443 = vpop.f32.mrf.mxu0
    %v444 = vadd.f32 %v112, %v443
    %445 = vdwg.mxu0
    %446 = vmatprep.subr.bf16.mxu0 %v300
    %447 = vmatpush1.bf16.msra.mxu0 %v299
    %448 = vmatprep.subr.bf16.mxu0 %v296
    %449 = vmatpush1.bf16.msra.mxu0 %v295
    %450 = vmatprep.subr.bf16.mxu0 %v292
    %451 = vmatpush1.bf16.msra.mxu0 %v291
    %452 = vmatprep.subr.bf16.mxu0 %v288
    %453 = vmatpush1.bf16.msra.mxu0 %v287
    %454 = vmatprep.subr.bf16.mxu0 %v284
    %455 = vmatpush1.bf16.msra.mxu0 %v283
    %456 = vmatprep.subr.bf16.mxu0 %v280
    %457 = vmatpush1.bf16.msra.mxu0 %v279
    %458 = vmatprep.subr.bf16.mxu0 %v276
    %459 = vmatpush1.bf16.msra.mxu0 %v275
    %460 = vmatprep.subr.bf16.mxu0 %v272
    %461 = vmatpush1.bf16.msra.mxu0 %v271
    %462 = vmatprep.subr.bf16.mxu0 0
    %463 = vmatpush2.bf16.msra.mxu0 0
    %464 = vmatprep.subr.bf16.mxu0 0
    %465 = vmatpush2.bf16.msra.mxu0 0
    %466 = vmatprep.subr.bf16.mxu0 0
    %467 = vmatpush2.bf16.msra.mxu0 0
    %468 = vmatprep.subr.bf16.mxu0 0
    %469 = vmatpush2.bf16.msra.mxu0 0
    %470 = vmatprep.subr.bf16.mxu0 0
    %471 = vmatpush2.bf16.msra.mxu0 0
    %472 = vmatprep.subr.bf16.mxu0 0
    %473 = vmatpush2.bf16.msra.mxu0 0
    %474 = vmatprep.subr.bf16.mxu0 0
    %475 = vmatpush2.bf16.msra.mxu0 0
    %476 = vmatprep.subr.bf16.mxu0 0
    %477 = vmatpush2.bf16.msra.mxu0 0
    %478 = vmatprep.mubr.bf16.mxu0 0
    %479 = vmatmul.mubr.bf16.gmra.mxu0 %v157
    %v480 = vpop.f32.mrf.mxu0
    %v481 = vadd.f32 %v116, %v480
    %v482 = vpop.f32.mrf.mxu0
    %v483 = vadd.f32 %v120, %v482
    %v484 = vpop.f32.mrf.mxu0
    %v485 = vadd.f32 %v116, %v484
    %v486 = vpop.f32.mrf.mxu0
    %v487 = vadd.f32 %v120, %v486
    %488 = vmatprep.mubr.bf16.mxu0 0
    %489 = vmatmul.mubr.bf16.gmra.mxu0 %v158
    %v490 = vpop.f32.mrf.mxu0
    %v491 = vadd.f32 %v116, %v490
    %v492 = vpop.f32.mrf.mxu0
    %v493 = vadd.f32 %v120, %v492
    %v494 = vpop.f32.mrf.mxu0
    %v495 = vadd.f32 %v116, %v494
    %v496 = vpop.f32.mrf.mxu0
    %v497 = vadd.f32 %v120, %v496
    %498 = vmatprep.mubr.bf16.mxu0 0
    %499 = vmatmul.mubr.bf16.gmra.mxu0 %v159
    %v500 = vpop.f32.mrf.mxu0
    %v501 = vadd.f32 %v116, %v500
    %v502 = vpop.f32.mrf.mxu0
    %v503 = vadd.f32 %v120, %v502
    %v504 = vpop.f32.mrf.mxu0
    %v505 = vadd.f32 %v116, %v504
    %v506 = vpop.f32.mrf.mxu0
    %v507 = vadd.f32 %v120, %v506
    %508 = vmatprep.mubr.bf16.mxu0 0
    %509 = vmatmul.mubr.bf16.gmra.mxu0 %v160
    %v510 = vpop.f32.mrf.mxu0
    %v511 = vadd.f32 %v116, %v510
    %v512 = vpop.f32.mrf.mxu0
    %v513 = vadd.f32 %v120, %v512
    %v514 = vpop.f32.mrf.mxu0
    %v515 = vadd.f32 %v116, %v514
    %v516 = vpop.f32.mrf.mxu0
    %v517 = vadd.f32 %v120, %v516
    %518 = vmatprep.mubr.bf16.mxu0 0
    %519 = vmatmul.mubr.bf16.gmra.mxu0 %v161
    %v520 = vpop.f32.mrf.mxu0
    %v521 = vadd.f32 %v116, %v520
    %v522 = vpop.f32.mrf.mxu0
    %v523 = vadd.f32 %v120, %v522
    %v524 = vpop.f32.mrf.mxu0
    %v525 = vadd.f32 %v116, %v524
    %v526 = vpop.f32.mrf.mxu0
    %v527 = vadd.f32 %v120, %v526
    %528 = vmatprep.mubr.bf16.mxu0 0
    %529 = vmatmul.mubr.bf16.gmra.mxu0 %v162
    %v530 = vpop.f32.mrf.mxu0
    %v531 = vadd.f32 %v116, %v530
    %v532 = vpop.f32.mrf.mxu0
    %v533 = vadd.f32 %v120, %v532
    %v534 = vpop.f32.mrf.mxu0
    %v535 = vadd.f32 %v116, %v534
    %v536 = vpop.f32.mrf.mxu0
    %v537 = vadd.f32 %v120, %v536
    %538 = vmatprep.mubr.bf16.mxu0 0
    %539 = vmatmul.mubr.bf16.gmra.mxu0 %v163
    %v540 = vpop.f32.mrf.mxu0
    %v541 = vadd.f32 %v116, %v540
    %v542 = vpop.f32.mrf.mxu0
    %v543 = vadd.f32 %v120, %v542
    %v544 = vpop.f32.mrf.mxu0
    %v545 = vadd.f32 %v116, %v544
    %v546 = vpop.f32.mrf.mxu0
    %v547 = vadd.f32 %v120, %v546
    %548 = vmatprep.mubr.bf16.mxu0 0
    %549 = vmatmul.mubr.bf16.gmra.mxu0 %v164
    %v550 = vpop.f32.mrf.mxu0
    %v551 = vadd.f32 %v116, %v550
    %v552 = vpop.f32.mrf.mxu0
    %v553 = vadd.f32 %v120, %v552
    %v554 = vpop.f32.mrf.mxu0
    %v555 = vadd.f32 %v116, %v554
    %v556 = vpop.f32.mrf.mxu0
    %v557 = vadd.f32 %v120, %v556
    %558 = vdwg.mxu0
    %v559 = vmax.f32 %v368, 0.0
    %v560 = vmax.f32 %v370, 0.0
    %v561 = vmax.f32 %v481, 0.0
    %v562 = vmax.f32 %v483, 0.0
    %v563 = vmax.f32 %v372, 0.0
    %v564 = vmax.f32 %v374, 0.0
    %v565 = vmax.f32 %v485, 0.0
    %v566 = vmax.f32 %v487, 0.0
    %v567 = vmax.f32 %v378, 0.0
    %v568 = vmax.f32 %v380, 0.0
    %v569 = vmax.f32 %v491, 0.0
    %v570 = vmax.f32 %v493, 0.0
    %v571 = vmax.f32 %v382, 0.0
    %v572 = vmax.f32 %v384, 0.0
    %v573 = vmax.f32 %v495, 0.0
    %v574 = vmax.f32 %v497, 0.0
    %v575 = vmax.f32 %v388, 0.0
    %v576 = vmax.f32 %v390, 0.0
    %v577 = vmax.f32 %v501, 0.0
    %v578 = vmax.f32 %v503, 0.0
    %v579 = vmax.f32 %v392, 0.0
    %v580 = vmax.f32 %v394, 0.0
    %v581 = vmax.f32 %v505, 0.0
    %v582 = vmax.f32 %v507, 0.0
    %v583 = vmax.f32 %v398, 0.0
    %v584 = vmax.f32 %v400, 0.0
    %v585 = vmax.f32 %v511, 0.0
    %v586 = vmax.f32 %v513, 0.0
    %v587 = vmax.f32 %v402, 0.0
    %v588 = vmax.f32 %v404, 0.0
    %v589 = vmax.f32 %v515, 0.0
    %v590 = vmax.f32 %v517, 0.0
    %v591 = vmax.f32 %v408, 0.0
    %v592 = vmax.f32 %v410, 0.0
    %v593 = vmax.f32 %v521, 0.0
    %v594 = vmax.f32 %v523, 0.0
    %v595 = vmax.f32 %v412, 0.0
    %v596 = vmax.f32 %v414, 0.0
    %v597 = vmax.f32 %v525, 0.0
    %v598 = vmax.f32 %v527, 0.0
    %v599 = vmax.f32 %v418, 0.0
    %v600 = vmax.f32 %v420, 0.0
    %v601 = vmax.f32 %v531, 0.0
    %v602 = vmax.f32 %v533, 0.0
    %v603 = vmax.f32 %v422, 0.0
    %v604 = vmax.f32 %v424, 0.0
    %v605 = vmax.f32 %v535, 0.0
    %v606 = vmax.f32 %v537, 0.0
    %v607 = vmax.f32 %v428, 0.0
    %v608 = vmax.f32 %v430, 0.0
    %v609 = vmax.f32 %v541, 0.0
    %v610 = vmax.f32 %v543, 0.0
    %v611 = vmax.f32 %v432, 0.0
    %v612 = vmax.f32 %v434, 0.0
    %v613 = vmax.f32 %v545, 0.0
    %v614 = vmax.f32 %v547, 0.0
    %v615 = vmax.f32 %v438, 0.0
    %v616 = vmax.f32 %v440, 0.0
    %v617 = vmax.f32 %v551, 0.0
    %v618 = vmax.f32 %v553, 0.0
    %v619 = vmax.f32 %v442, 0.0
    %v620 = vmax.f32 %v444, 0.0
    %v621 = vmax.f32 %v555, 0.0
    %v622 = vmax.f32 %v557, 0.0
    %v623 = vpack.c.bf16 %v563, %v559
    %v624 = vpack.c.bf16 %v564, %v560
    %v625 = vpack.c.bf16 %v565, %v561
    %v626 = vpack.c.bf16 %v566, %v562
    %v627 = vpack.c.bf16 %v571, %v567
    %v628 = vpack.c.bf16 %v572, %v568
    %v629 = vpack.c.bf16 %v573, %v569
    %v630 = vpack.c.bf16 %v574, %v570
    %v631 = vpack.c.bf16 %v579, %v575
    %v632 = vpack.c.bf16 %v580, %v576
    %v633 = vpack.c.bf16 %v581, %v577
    %v634 = vpack.c.bf16 %v582, %v578
    %v635 = vpack.c.bf16 %v587, %v583
    %v636 = vpack.c.bf16 %v588, %v584
    %v637 = vpack.c.bf16 %v589, %v585
    %v638 = vpack.c.bf16 %v590, %v586
    %v639 = vpack.c.bf16 %v595, %v591
    %v640 = vpack.c.bf16 %v596, %v592
    %v641 = vpack.c.bf16 %v597, %v593
    %v642 = vpack.c.bf16 %v598, %v594
    %v643 = vpack.c.bf16 %v603, %v599
    %v644 = vpack.c.bf16 %v604, %v600
    %v645 = vpack.c.bf16 %v605, %v601
    %v646 = vpack.c.bf16 %v606, %v602
    %v647 = vpack.c.bf16 %v611, %v607
    %v648 = vpack.c.bf16 %v612, %v608
    %v649 = vpack.c.bf16 %v613, %v609
    %v650 = vpack.c.bf16 %v614, %v610
    %v651 = vpack.c.bf16 %v619, %v615
    %v652 = vpack.c.bf16 %v620, %v616
    %v653 = vpack.c.bf16 %v621, %v617
    %v654 = vpack.c.bf16 %v622, %v618
    %v687 = vunpack.c.l.b16 %v623
    %v688 = vunpack.c.l.b16 %v624
    %v689 = vunpack.c.l.b16 %v625
    %v690 = vunpack.c.l.b16 %v626
    %v691 = vunpack.c.h.b16 %v623
    %v692 = vunpack.c.h.b16 %v624
    %v693 = vunpack.c.h.b16 %v625
    %v694 = vunpack.c.h.b16 %v626
    %v695 = vunpack.c.l.b16 %v627
    %v696 = vunpack.c.l.b16 %v628
    %v697 = vunpack.c.l.b16 %v629
    %v698 = vunpack.c.l.b16 %v630
    %v699 = vunpack.c.h.b16 %v627
    %v700 = vunpack.c.h.b16 %v628
    %v701 = vunpack.c.h.b16 %v629
    %v702 = vunpack.c.h.b16 %v630
    %v703 = vunpack.c.l.b16 %v631
    %v704 = vunpack.c.l.b16 %v632
    %v705 = vunpack.c.l.b16 %v633
    %v706 = vunpack.c.l.b16 %v634
    %v707 = vunpack.c.h.b16 %v631
    %v708 = vunpack.c.h.b16 %v632
    %v709 = vunpack.c.h.b16 %v633
    %v710 = vunpack.c.h.b16 %v634
    %v711 = vunpack.c.l.b16 %v635
    %v712 = vunpack.c.l.b16 %v636
    %v713 = vunpack.c.l.b16 %v637
    %v714 = vunpack.c.l.b16 %v638
    %v715 = vunpack.c.h.b16 %v635
    %v716 = vunpack.c.h.b16 %v636
    %v717 = vunpack.c.h.b16 %v637
    %v718 = vunpack.c.h.b16 %v638
    %v719 = vunpack.c.l.b16 %v639
    %v720 = vunpack.c.l.b16 %v640
    %v721 = vunpack.c.l.b16 %v641
    %v722 = vunpack.c.l.b16 %v642
    %v723 = vunpack.c.h.b16 %v639
    %v724 = vunpack.c.h.b16 %v640
    %v725 = vunpack.c.h.b16 %v641
    %v726 = vunpack.c.h.b16 %v642
    %v727 = vunpack.c.l.b16 %v643
    %v728 = vunpack.c.l.b16 %v644
    %v729 = vunpack.c.l.b16 %v645
    %v730 = vunpack.c.l.b16 %v646
    %v731 = vunpack.c.h.b16 %v643
    %v732 = vunpack.c.h.b16 %v644
    %v733 = vunpack.c.h.b16 %v645
    %v734 = vunpack.c.h.b16 %v646
    %v735 = vunpack.c.l.b16 %v647
    %v736 = vunpack.c.l.b16 %v648
    %v737 = vunpack.c.l.b16 %v649
    %v738 = vunpack.c.l.b16 %v650
    %v739 = vunpack.c.h.b16 %v647
    %v740 = vunpack.c.h.b16 %v648
    %v741 = vunpack.c.h.b16 %v649
    %v742 = vunpack.c.h.b16 %v650
    %v743 = vunpack.c.l.b16 %v651
    %v744 = vunpack.c.l.b16 %v652
    %v745 = vunpack.c.l.b16 %v653
    %v746 = vunpack.c.l.b16 %v654
    %v747 = vunpack.c.h.b16 %v651
    %v748 = vunpack.c.h.b16 %v652
    %v749 = vunpack.c.h.b16 %v653
    %v750 = vunpack.c.h.b16 %v654
    %v751 = vpack.c.b16 %v688, %v687
    %v752 = vpack.c.b16 %v690, %v689
    %v753 = vpack.c.b16 %v692, %v691
    %v754 = vpack.c.b16 %v694, %v693
    %v755 = vpack.c.b16 %v696, %v695
    %v756 = vpack.c.b16 %v698, %v697
    %v757 = vpack.c.b16 %v700, %v699
    %v758 = vpack.c.b16 %v702, %v701
    %v759 = vpack.c.b16 %v704, %v703
    %v760 = vpack.c.b16 %v706, %v705
    %v761 = vpack.c.b16 %v708, %v707
    %v762 = vpack.c.b16 %v710, %v709
    %v763 = vpack.c.b16 %v712, %v711
    %v764 = vpack.c.b16 %v714, %v713
    %v765 = vpack.c.b16 %v716, %v715
    %v766 = vpack.c.b16 %v718, %v717
    %v767 = vpack.c.b16 %v720, %v719
    %v768 = vpack.c.b16 %v722, %v721
    %v769 = vpack.c.b16 %v724, %v723
    %v770 = vpack.c.b16 %v726, %v725
    %v771 = vpack.c.b16 %v728, %v727
    %v772 = vpack.c.b16 %v730, %v729
    %v773 = vpack.c.b16 %v732, %v731
    %v774 = vpack.c.b16 %v734, %v733
    %v775 = vpack.c.b16 %v736, %v735
    %v776 = vpack.c.b16 %v738, %v737
    %v777 = vpack.c.b16 %v740, %v739
    %v778 = vpack.c.b16 %v742, %v741
    %v779 = vpack.c.b16 %v744, %v743
    %v780 = vpack.c.b16 %v746, %v745
    %v781 = vpack.c.b16 %v748, %v747
    %v782 = vpack.c.b16 %v750, %v749
    %815 = vst [vmem:[#allocation8] sm:$0xff] %v751
    %816 = vst [vmem:[#allocation8 + $0x8] sm:$0xff] %v752
    %817 = vst [vmem:[#allocation8 + $0x10] sm:$0xff] %v753
    %818 = vst [vmem:[#allocation8 + $0x18] sm:$0xff] %v754
    %819 = vst [vmem:[#allocation8 + $0x20] sm:$0xff] %v755
    %820 = vst [vmem:[#allocation8 + $0x28] sm:$0xff] %v756
    %821 = vst [vmem:[#allocation8 + $0x30] sm:$0xff] %v757
    %822 = vst [vmem:[#allocation8 + $0x38] sm:$0xff] %v758
    %823 = vst [vmem:[#allocation8 + $0x40] sm:$0xff] %v759
    %824 = vst [vmem:[#allocation8 + $0x48] sm:$0xff] %v760
    %825 = vst [vmem:[#allocation8 + $0x50] sm:$0xff] %v761
    %826 = vst [vmem:[#allocation8 + $0x58] sm:$0xff] %v762
    %827 = vst [vmem:[#allocation8 + $0x60] sm:$0xff] %v763
    %828 = vst [vmem:[#allocation8 + $0x68] sm:$0xff] %v764
    %829 = vst [vmem:[#allocation8 + $0x70] sm:$0xff] %v765
    %830 = vst [vmem:[#allocation8 + $0x78] sm:$0xff] %v766
    %831 = vst [vmem:[#allocation8 + $0x80] sm:$0xff] %v767
    %832 = vst [vmem:[#allocation8 + $0x88] sm:$0xff] %v768
    %833 = vst [vmem:[#allocation8 + $0x90] sm:$0xff] %v769
    %834 = vst [vmem:[#allocation8 + $0x98] sm:$0xff] %v770
    %835 = vst [vmem:[#allocation8 + $0xa0] sm:$0xff] %v771
    %836 = vst [vmem:[#allocation8 + $0xa8] sm:$0xff] %v772
    %837 = vst [vmem:[#allocation8 + $0xb0] sm:$0xff] %v773
    %838 = vst [vmem:[#allocation8 + $0xb8] sm:$0xff] %v774
    %839 = vst [vmem:[#allocation8 + $0xc0] sm:$0xff] %v775
    %840 = vst [vmem:[#allocation8 + $0xc8] sm:$0xff] %v776
    %841 = vst [vmem:[#allocation8 + $0xd0] sm:$0xff] %v777
    %842 = vst [vmem:[#allocation8 + $0xd8] sm:$0xff] %v778
    %843 = vst [vmem:[#allocation8 + $0xe0] sm:$0xff] %v779
    %844 = vst [vmem:[#allocation8 + $0xe8] sm:$0xff] %v780
    %845 = vst [vmem:[#allocation8 + $0xf0] sm:$0xff] %v781
    %846 = vst [vmem:[#allocation8 + $0xf8] sm:$0xff] %v782
    // Predicated region
    $region26: #{tpu_custom_call.1} parent=1 // pred_check
      _
    $region27: #{tpu_custom_call.1} parent=1 // pred_check_branch
      %848 = sbr.rel (0) target = $region29
    $region28: #{tpu_custom_call.1} parent=1 // pred_region
      %s850 = ssub.s32 4096, 4096
      %851 = vsyncadd [#allocation4], %s850
      %s852 = sshll.u32 [#allocation8], 4
      %s853 = int_to_ptr.vmem [resolvable:$true] %s852
      %858 = dma.vmem_to_hbm [thread:$0]  %s853, 4096, %s3, [#allocation4], 256, 256, 16
    $region29: #{tpu_custom_call.1} parent=1 // pred_fallthru
      _
    // Predicated region
    $region30: #{tpu_custom_call.1} parent=1 // pred_check
      _
    $region31: #{tpu_custom_call.1} parent=1 // pred_check_branch
      %860 = sbr.rel (0) target = $region33
    $region32: #{tpu_custom_call.1} parent=1 // pred_region
      %861 = dma.done [#allocation4], 4096
    $region33: #{tpu_custom_call.1} parent=1 // pred_fallthru
      _
    %862 = vsyncpa [#allocation3], 1
    %863 = vsyncpa [#allocation6], 1
    %864 = vsyncpa [#allocation4], 1

</llo_original>
